<compile_context>
chip_gen: v5e
topology: v5e:2x2
jax: 0.10.0
libtpu: 0.0.40
codegen_flags: <defaults>
</compile_context>

<pallas_src>
import jax
import jax.numpy as jnp
from jax.experimental import pallas as pl
from jax.experimental.pallas import tpu as pltpu


def mlp_kernel(xT_ref, w1_ref, b1_ref, wmid_ref, bmid_ref, w9_ref, b9_ref, oT_ref):
    # fc1 + tanh on the VPU (K=2 is too small to be worth an MXU pass):
    #   h = tanh(w1[:,0] (x) x_row0 + w1[:,1] (x) x_row1 + b1)         -> (N, Bt) f32
    x0 = xT_ref[0:1, :]                       # (1, Bt)
    x1 = xT_ref[1:2, :]                       # (1, Bt)
    h = jnp.tanh(w1_ref[:, 0:1] * x0 + w1_ref[:, 1:2] * x1 + b1_ref[...])

    # fc2..fc8 + tanh: bf16 MXU dots with f32 accumulation (static unroll, 7 layers).
    for i in range(wmid_ref.shape[0]):
        z = jnp.dot(
            wmid_ref[i],                       # (N, N) bf16, VMEM-resident
            h.astype(jnp.bfloat16),            # (N, Bt) bf16
            preferred_element_type=jnp.float32,
        )
        h = jnp.tanh(z + bmid_ref[i])          # bias + tanh in f32

    # fc9 (no activation) off the MXU: multiply (VPU) + sublane reduce (XLU).
    out = jnp.sum(w9_ref[...] * h, axis=0, keepdims=True) + b9_ref[...]   # (1, Bt)
    oT_ref[...] = out.astype(oT_ref.dtype)


def _round_up(a, m):
    return pl.cdiv(a, m) * m


def mlp_forward(x, kparams, *, batch_tile=4096):
    """x: (B, 2) float32 -> (B, 1) float32."""
    w1, b1, wmid16, bmid, w9c, b9 = kparams
    B = x.shape[0]
    N = w1.shape[0]
    n_mid = wmid16.shape[0]

    # Batch tile: multiple of 128 (lane width), big by default, but capped so that
    # any B > 128 gives at least 2 tiles (both v7x TensorCores get work).
    bt = max(128, min(batch_tile, _round_up(B, 128)))
    if B > 128:
        bt = min(bt, _round_up(pl.cdiv(B, 2), 128))
    bt = _round_up(bt, 128)
    grid = (pl.cdiv(B, bt),)                   # ragged last tile handled by Pallas

    xT = x.T                                    # (2, B) feature-major (cheap host op)

    def resident(a):                            # weights stay in VMEM across all steps
        return pl.BlockSpec(a.shape, lambda i: (0,) * a.ndim)

    flops = 2 * B * (2 * N + n_mid * N * N + N)
    transcendentals = (1 + n_mid) * B * N      # 8 tanh layers
    bytes_accessed = (
        4 * (x.size + B + w1.size + b1.size + bmid.size + w9c.size + b9.size)
        + 2 * wmid16.size
    )

    outT = pl.pallas_call(
        mlp_kernel,
        out_shape=jax.ShapeDtypeStruct((1, B), jnp.float32),
        grid_spec=pltpu.PrefetchScalarGridSpec(
            num_scalar_prefetch=0,
            grid=grid,
            in_specs=[
                pl.BlockSpec((2, bt), lambda i: (0, i)),   # x^T batch tiles (pipelined)
                resident(w1),       # (N, 2)   f32
                resident(b1),       # (N, 1)   f32
                resident(wmid16),   # (7, N, N) bf16
                resident(bmid),     # (7, N, 1) f32
                resident(w9c),      # (N, 1)   f32
                resident(b9),       # (1, 1)   f32
            ],
            out_specs=pl.BlockSpec((1, bt), lambda i: (0, i)),  # lane-dense output
        ),
        compiler_params=pltpu.CompilerParams(
            dimension_semantics=("parallel",),   # shard batch tiles across cores (v7x)
            vmem_limit_bytes=32 * 1024 * 1024,
        ),
        cost_estimate=pl.CostEstimate(
            flops=flops,
            transcendentals=transcendentals,
            bytes_accessed=bytes_accessed,
        ),
    )(xT, w1, b1, wmid16, bmid, w9c, b9)

    return outT.reshape(B, 1)                   # (1, B) -> (B, 1) is a free reshape


# ----------------------------- parameters & references -----------------------------

def init_params(key, num_node):
    # Deterministic init mimicking nn.Linear's uniform(-1/sqrt(fan_in), +1/sqrt(fan_in)),
    # kept in PyTorch (out_features, in_features) layout, f32 master weights.
    ks = jax.random.split(key, 18)

    def linear(kw, kb, fan_in, fan_out):
        bound = float(fan_in) ** -0.5
        w = jax.random.uniform(kw, (fan_out, fan_in), jnp.float32, -bound, bound)
        b = jax.random.uniform(kb, (fan_out,), jnp.float32, -bound, bound)
        return w, b

    w1, b1 = linear(ks[0], ks[1], 2, num_node)
    mids = [linear(ks[2 + 2 * i], ks[3 + 2 * i], num_node, num_node) for i in range(7)]
    wmid = jnp.stack([w for w, _ in mids], axis=0)   # (7, N, N) f32
    bmid = jnp.stack([b for _, b in mids], axis=0)   # (7, N)    f32
    w9, b9 = linear(ks[16], ks[17], num_node, 1)
    return (w1, b1, wmid, bmid, w9, b9)


def prepare_kernel_params(params):
    # Kernel-side layout: biases as columns, mid weights cast to bf16 (MXU inputs),
    # fc9 weight stored as an (N,1) column for the VPU*+XLU-reduce path.
    w1, b1, wmid, bmid, w9, b9 = params
    return (
        w1,                               # (N, 2)    f32
        b1[:, None],                      # (N, 1)    f32
        wmid.astype(jnp.bfloat16),        # (7, N, N) bf16
        bmid[:, :, None],                 # (7, N, 1) f32
        w9.T,                             # (N, 1)    f32
        b9[:, None],                      # (1, 1)    f32
    )


def reference_forward_f32(x, params):
    # Faithful f32 reference of the PyTorch module.
    w1, b1, wmid, bmid, w9, b9 = params
    hp = jax.lax.Precision.HIGHEST
    h = jnp.tanh(jnp.dot(x, w1.T, precision=hp) + b1)
    for i in range(wmid.shape[0]):
        h = jnp.tanh(jnp.dot(h, wmid[i].T, precision=hp) + bmid[i])
    return jnp.dot(h, w9.T, precision=hp) + b9


def reference_forward_matched(x, kparams):
    # Numerics-matched reference (same bf16 mid-layer inputs / f32 accumulation,
    # same VPU-style fc1 and elementwise fc9) for a tight plumbing check.
    w1, b1, wmid16, bmid, w9c, b9 = kparams
    h = jnp.tanh(
        x[:, 0:1] * w1[:, 0][None, :] + x[:, 1:2] * w1[:, 1][None, :] + b1[:, 0][None, :]
    )
    for i in range(wmid16.shape[0]):
        z = jnp.dot(h.astype(jnp.bfloat16), wmid16[i].T,
                    preferred_element_type=jnp.float32)
        h = jnp.tanh(z + bmid[i, :, 0][None, :])
    return (h * w9c[:, 0][None, :]).sum(axis=1, keepdims=True) + b9[0, 0]


if __name__ == "__main__":
    key = jax.random.PRNGKey(0)
    kx, kp = jax.random.split(key)
    num_node = 32
    params = init_params(kp, num_node)
    kparams = prepare_kernel_params(params)

    # batch=8    -> single padded 128-lane tile (edge-clamped DMAs)
    # batch=1000 -> 2 tiles of 512 with a ragged last tile
    # batch=1024 -> 4 tiles of 256 (multi-tile / megacore path)
    for batch, tile in ((8, 4096), (1000, 4096), (1024, 256)):
        x = jax.random.normal(
            jax.random.fold_in(kx, batch), (batch, 2), dtype=jnp.float32
        )
        out = jax.block_until_ready(mlp_forward(x, kparams, batch_tile=tile))
        assert out.shape == (batch, 1)

        ref_m = reference_forward_matched(x, kparams)   # same numerics as kernel
        ref_f = reference_forward_f32(x, params)        # true f32 module semantics
        err_m = float(jnp.max(jnp.abs(out - ref_m)))
        err_f = float(jnp.max(jnp.abs(out - ref_f)))
        assert err_m < 5e-4, ("matched-ref mismatch", batch, err_m)
        assert err_f < 3e-2, ("f32-ref mismatch (bf16 mid layers)", batch, err_f)

    print("KERNEL_OK")
</pallas_src>

<mosaic_0001>
module attributes {stable_mosaic.version = 11 : i64} {
  func.func @mlp_kernel(%arg0: i32, %arg1: memref<2x128xf32, #tpu.memory_space<vmem>>, %arg2: memref<32x2xf32, #tpu.memory_space<vmem>>, %arg3: memref<32x1xf32, #tpu.memory_space<vmem>>, %arg4: memref<7x32x32xbf16, #tpu.memory_space<vmem>>, %arg5: memref<7x32x1xf32, #tpu.memory_space<vmem>>, %arg6: memref<32x1xf32, #tpu.memory_space<vmem>>, %arg7: memref<1x1xf32, #tpu.memory_space<vmem>>, %arg8: memref<1x128xf32, #tpu.memory_space<vmem>>) attributes {dimension_semantics = [#tpu.dimension_semantics<parallel>], iteration_bounds = array<i64: 1>, scalar_prefetch = 0 : i64, scratch_operands = 0 : i64, tpu.core_type = #tpu.core_type<tc>, window_params = [{transform_indices = @transform_0, window_bounds = array<i64: 2, 128>}, {pipeline_mode = #tpu.pipeline_mode<synchronous>, transform_indices = @transform_1, window_bounds = array<i64: 32, 2>}, {pipeline_mode = #tpu.pipeline_mode<synchronous>, transform_indices = @transform_2, window_bounds = array<i64: 32, 1>}, {pipeline_mode = #tpu.pipeline_mode<synchronous>, transform_indices = @transform_3, window_bounds = array<i64: 7, 32, 32>}, {pipeline_mode = #tpu.pipeline_mode<synchronous>, transform_indices = @transform_4, window_bounds = array<i64: 7, 32, 1>}, {pipeline_mode = #tpu.pipeline_mode<synchronous>, transform_indices = @transform_5, window_bounds = array<i64: 32, 1>}, {pipeline_mode = #tpu.pipeline_mode<synchronous>, transform_indices = @transform_6, window_bounds = array<i64: 1, 1>}, {transform_indices = @transform_7, window_bounds = array<i64: 1, 128>}]} {
    %c0 = arith.constant 0 : index
    %c0_0 = arith.constant 0 : index
    %0 = vector.load %arg1[%c0, %c0_0] : memref<2x128xf32, #tpu.memory_space<vmem>>, vector<1x128xf32>
    %c1 = arith.constant 1 : index
    %c0_1 = arith.constant 0 : index
    %1 = vector.load %arg1[%c1, %c0_1] : memref<2x128xf32, #tpu.memory_space<vmem>>, vector<1x128xf32>
    %c0_2 = arith.constant 0 : index
    %c0_3 = arith.constant 0 : index
    %2 = vector.load %arg2[%c0_2, %c0_3] : memref<32x2xf32, #tpu.memory_space<vmem>>, vector<32x1xf32>
    %3 = vector.broadcast %2 : vector<32x1xf32> to vector<32x128xf32>
    %4 = vector.broadcast %0 : vector<1x128xf32> to vector<32x128xf32>
    %5 = arith.mulf %3, %4 : vector<32x128xf32>
    %c0_4 = arith.constant 0 : index
    %c1_5 = arith.constant 1 : index
    %6 = vector.load %arg2[%c0_4, %c1_5] : memref<32x2xf32, #tpu.memory_space<vmem>>, vector<32x1xf32>
    %7 = vector.broadcast %6 : vector<32x1xf32> to vector<32x128xf32>
    %8 = vector.broadcast %1 : vector<1x128xf32> to vector<32x128xf32>
    %9 = arith.mulf %7, %8 : vector<32x128xf32>
    %10 = arith.addf %5, %9 : vector<32x128xf32>
    %c0_6 = arith.constant 0 : index
    %c0_7 = arith.constant 0 : index
    %11 = vector.load %arg3[%c0_6, %c0_7] : memref<32x1xf32, #tpu.memory_space<vmem>>, vector<32x1xf32>
    %12 = vector.broadcast %11 : vector<32x1xf32> to vector<32x128xf32>
    %13 = arith.addf %10, %12 : vector<32x128xf32>
    %14 = math.tanh %13 : vector<32x128xf32>
    %c0_8 = arith.constant 0 : index
    %c0_9 = arith.constant 0 : index
    %c0_10 = arith.constant 0 : index
    %15 = vector.load %arg4[%c0_8, %c0_9, %c0_10] : memref<7x32x32xbf16, #tpu.memory_space<vmem>>, vector<1x32x32xbf16>
    %16 = vector.shape_cast %15 : vector<1x32x32xbf16> to vector<32x32xbf16>
    %17 = arith.truncf %14 : vector<32x128xf32> to vector<32x128xbf16>
    %cst = arith.constant dense<0.000000e+00> : vector<32x128xf32>
    %18 = tpu.matmul %16, %17, %cst {dimension_numbers = #tpu.dot_dimension_numbers<[1], [0], [0], [1], [0, 0, 1, 1], [], []>} : vector<32x32xbf16>, vector<32x128xbf16>, vector<32x128xf32> -> vector<32x128xf32>
    %c0_11 = arith.constant 0 : index
    %c0_12 = arith.constant 0 : index
    %c0_13 = arith.constant 0 : index
    %19 = vector.load %arg5[%c0_11, %c0_12, %c0_13] : memref<7x32x1xf32, #tpu.memory_space<vmem>>, vector<1x32x1xf32>
    %20 = vector.shape_cast %19 : vector<1x32x1xf32> to vector<32x1xf32>
    %21 = vector.broadcast %20 : vector<32x1xf32> to vector<32x128xf32>
    %22 = arith.addf %18, %21 : vector<32x128xf32>
    %23 = math.tanh %22 : vector<32x128xf32>
    %c1_14 = arith.constant 1 : index
    %c0_15 = arith.constant 0 : index
    %c0_16 = arith.constant 0 : index
    %24 = vector.load %arg4[%c1_14, %c0_15, %c0_16] : memref<7x32x32xbf16, #tpu.memory_space<vmem>>, vector<1x32x32xbf16>
    %25 = vector.shape_cast %24 : vector<1x32x32xbf16> to vector<32x32xbf16>
    %26 = arith.truncf %23 : vector<32x128xf32> to vector<32x128xbf16>
    %cst_17 = arith.constant dense<0.000000e+00> : vector<32x128xf32>
    %27 = tpu.matmul %25, %26, %cst_17 {dimension_numbers = #tpu.dot_dimension_numbers<[1], [0], [0], [1], [0, 0, 1, 1], [], []>} : vector<32x32xbf16>, vector<32x128xbf16>, vector<32x128xf32> -> vector<32x128xf32>
    %c1_18 = arith.constant 1 : index
    %c0_19 = arith.constant 0 : index
    %c0_20 = arith.constant 0 : index
    %28 = vector.load %arg5[%c1_18, %c0_19, %c0_20] : memref<7x32x1xf32, #tpu.memory_space<vmem>>, vector<1x32x1xf32>
    %29 = vector.shape_cast %28 : vector<1x32x1xf32> to vector<32x1xf32>
    %30 = vector.broadcast %29 : vector<32x1xf32> to vector<32x128xf32>
    %31 = arith.addf %27, %30 : vector<32x128xf32>
    %32 = math.tanh %31 : vector<32x128xf32>
    %c2 = arith.constant 2 : index
    %c0_21 = arith.constant 0 : index
    %c0_22 = arith.constant 0 : index
    %33 = vector.load %arg4[%c2, %c0_21, %c0_22] : memref<7x32x32xbf16, #tpu.memory_space<vmem>>, vector<1x32x32xbf16>
    %34 = vector.shape_cast %33 : vector<1x32x32xbf16> to vector<32x32xbf16>
    %35 = arith.truncf %32 : vector<32x128xf32> to vector<32x128xbf16>
    %cst_23 = arith.constant dense<0.000000e+00> : vector<32x128xf32>
    %36 = tpu.matmul %34, %35, %cst_23 {dimension_numbers = #tpu.dot_dimension_numbers<[1], [0], [0], [1], [0, 0, 1, 1], [], []>} : vector<32x32xbf16>, vector<32x128xbf16>, vector<32x128xf32> -> vector<32x128xf32>
    %c2_24 = arith.constant 2 : index
    %c0_25 = arith.constant 0 : index
    %c0_26 = arith.constant 0 : index
    %37 = vector.load %arg5[%c2_24, %c0_25, %c0_26] : memref<7x32x1xf32, #tpu.memory_space<vmem>>, vector<1x32x1xf32>
    %38 = vector.shape_cast %37 : vector<1x32x1xf32> to vector<32x1xf32>
    %39 = vector.broadcast %38 : vector<32x1xf32> to vector<32x128xf32>
    %40 = arith.addf %36, %39 : vector<32x128xf32>
    %41 = math.tanh %40 : vector<32x128xf32>
    %c3 = arith.constant 3 : index
    %c0_27 = arith.constant 0 : index
    %c0_28 = arith.constant 0 : index
    %42 = vector.load %arg4[%c3, %c0_27, %c0_28] : memref<7x32x32xbf16, #tpu.memory_space<vmem>>, vector<1x32x32xbf16>
    %43 = vector.shape_cast %42 : vector<1x32x32xbf16> to vector<32x32xbf16>
    %44 = arith.truncf %41 : vector<32x128xf32> to vector<32x128xbf16>
    %cst_29 = arith.constant dense<0.000000e+00> : vector<32x128xf32>
    %45 = tpu.matmul %43, %44, %cst_29 {dimension_numbers = #tpu.dot_dimension_numbers<[1], [0], [0], [1], [0, 0, 1, 1], [], []>} : vector<32x32xbf16>, vector<32x128xbf16>, vector<32x128xf32> -> vector<32x128xf32>
    %c3_30 = arith.constant 3 : index
    %c0_31 = arith.constant 0 : index
    %c0_32 = arith.constant 0 : index
    %46 = vector.load %arg5[%c3_30, %c0_31, %c0_32] : memref<7x32x1xf32, #tpu.memory_space<vmem>>, vector<1x32x1xf32>
    %47 = vector.shape_cast %46 : vector<1x32x1xf32> to vector<32x1xf32>
    %48 = vector.broadcast %47 : vector<32x1xf32> to vector<32x128xf32>
    %49 = arith.addf %45, %48 : vector<32x128xf32>
    %50 = math.tanh %49 : vector<32x128xf32>
    %c4 = arith.constant 4 : index
    %c0_33 = arith.constant 0 : index
    %c0_34 = arith.constant 0 : index
    %51 = vector.load %arg4[%c4, %c0_33, %c0_34] : memref<7x32x32xbf16, #tpu.memory_space<vmem>>, vector<1x32x32xbf16>
    %52 = vector.shape_cast %51 : vector<1x32x32xbf16> to vector<32x32xbf16>
    %53 = arith.truncf %50 : vector<32x128xf32> to vector<32x128xbf16>
    %cst_35 = arith.constant dense<0.000000e+00> : vector<32x128xf32>
    %54 = tpu.matmul %52, %53, %cst_35 {dimension_numbers = #tpu.dot_dimension_numbers<[1], [0], [0], [1], [0, 0, 1, 1], [], []>} : vector<32x32xbf16>, vector<32x128xbf16>, vector<32x128xf32> -> vector<32x128xf32>
    %c4_36 = arith.constant 4 : index
    %c0_37 = arith.constant 0 : index
    %c0_38 = arith.constant 0 : index
    %55 = vector.load %arg5[%c4_36, %c0_37, %c0_38] : memref<7x32x1xf32, #tpu.memory_space<vmem>>, vector<1x32x1xf32>
    %56 = vector.shape_cast %55 : vector<1x32x1xf32> to vector<32x1xf32>
    %57 = vector.broadcast %56 : vector<32x1xf32> to vector<32x128xf32>
    %58 = arith.addf %54, %57 : vector<32x128xf32>
    %59 = math.tanh %58 : vector<32x128xf32>
    %c5 = arith.constant 5 : index
    %c0_39 = arith.constant 0 : index
    %c0_40 = arith.constant 0 : index
    %60 = vector.load %arg4[%c5, %c0_39, %c0_40] : memref<7x32x32xbf16, #tpu.memory_space<vmem>>, vector<1x32x32xbf16>
    %61 = vector.shape_cast %60 : vector<1x32x32xbf16> to vector<32x32xbf16>
    %62 = arith.truncf %59 : vector<32x128xf32> to vector<32x128xbf16>
    %cst_41 = arith.constant dense<0.000000e+00> : vector<32x128xf32>
    %63 = tpu.matmul %61, %62, %cst_41 {dimension_numbers = #tpu.dot_dimension_numbers<[1], [0], [0], [1], [0, 0, 1, 1], [], []>} : vector<32x32xbf16>, vector<32x128xbf16>, vector<32x128xf32> -> vector<32x128xf32>
    %c5_42 = arith.constant 5 : index
    %c0_43 = arith.constant 0 : index
    %c0_44 = arith.constant 0 : index
    %64 = vector.load %arg5[%c5_42, %c0_43, %c0_44] : memref<7x32x1xf32, #tpu.memory_space<vmem>>, vector<1x32x1xf32>
    %65 = vector.shape_cast %64 : vector<1x32x1xf32> to vector<32x1xf32>
    %66 = vector.broadcast %65 : vector<32x1xf32> to vector<32x128xf32>
    %67 = arith.addf %63, %66 : vector<32x128xf32>
    %68 = math.tanh %67 : vector<32x128xf32>
    %c6 = arith.constant 6 : index
    %c0_45 = arith.constant 0 : index
    %c0_46 = arith.constant 0 : index
    %69 = vector.load %arg4[%c6, %c0_45, %c0_46] : memref<7x32x32xbf16, #tpu.memory_space<vmem>>, vector<1x32x32xbf16>
    %70 = vector.shape_cast %69 : vector<1x32x32xbf16> to vector<32x32xbf16>
    %71 = arith.truncf %68 : vector<32x128xf32> to vector<32x128xbf16>
    %cst_47 = arith.constant dense<0.000000e+00> : vector<32x128xf32>
    %72 = tpu.matmul %70, %71, %cst_47 {dimension_numbers = #tpu.dot_dimension_numbers<[1], [0], [0], [1], [0, 0, 1, 1], [], []>} : vector<32x32xbf16>, vector<32x128xbf16>, vector<32x128xf32> -> vector<32x128xf32>
    %c6_48 = arith.constant 6 : index
    %c0_49 = arith.constant 0 : index
    %c0_50 = arith.constant 0 : index
    %73 = vector.load %arg5[%c6_48, %c0_49, %c0_50] : memref<7x32x1xf32, #tpu.memory_space<vmem>>, vector<1x32x1xf32>
    %74 = vector.shape_cast %73 : vector<1x32x1xf32> to vector<32x1xf32>
    %75 = vector.broadcast %74 : vector<32x1xf32> to vector<32x128xf32>
    %76 = arith.addf %72, %75 : vector<32x128xf32>
    %77 = math.tanh %76 : vector<32x128xf32>
    %c0_51 = arith.constant 0 : index
    %c0_52 = arith.constant 0 : index
    %78 = vector.load %arg6[%c0_51, %c0_52] : memref<32x1xf32, #tpu.memory_space<vmem>>, vector<32x1xf32>
    %79 = vector.broadcast %78 : vector<32x1xf32> to vector<32x128xf32>
    %80 = arith.mulf %79, %77 : vector<32x128xf32>
    %cst_53 = arith.constant dense<0.000000e+00> : vector<128xf32>
    %81 = vector.multi_reduction <add>, %80, %cst_53 [0] : vector<32x128xf32> to vector<128xf32>
    %82 = vector.shape_cast %81 : vector<128xf32> to vector<1x128xf32>
    %c0_54 = arith.constant 0 : index
    %c0_55 = arith.constant 0 : index
    %83 = vector.load %arg7[%c0_54, %c0_55] : memref<1x1xf32, #tpu.memory_space<vmem>>, vector<1x1xf32>
    %84 = vector.broadcast %83 : vector<1x1xf32> to vector<1x128xf32>
    %85 = arith.addf %82, %84 : vector<1x128xf32>
    %c0_56 = arith.constant 0 : index
    %c0_57 = arith.constant 0 : index
    %86 = vector.load %arg8[%c0_56, %c0_57] : memref<1x128xf32, #tpu.memory_space<vmem>>, vector<1x128xf32>
    tpu.vector_store %arg8[%c0_56, %c0_57], %85 {strides = array<i32>} : memref<1x128xf32, #tpu.memory_space<vmem>>, vector<1x128xf32>,
    return
  }
  func.func @transform_0(%arg0: i32) -> (i32, i32) {
    %c0_i32 = arith.constant 0 : i32
    %c0_i32_0 = arith.constant 0 : i32
    return %c0_i32, %arg0 : i32, i32
  }
  func.func @transform_1(%arg0: i32) -> (i32, i32) {
    %c0_i32 = arith.constant 0 : i32
    %c0_i32_0 = arith.constant 0 : i32
    %c0_i32_1 = arith.constant 0 : i32
    return %c0_i32, %c0_i32_0 : i32, i32
  }
  func.func @transform_2(%arg0: i32) -> (i32, i32) {
    %c0_i32 = arith.constant 0 : i32
    %c0_i32_0 = arith.constant 0 : i32
    %c0_i32_1 = arith.constant 0 : i32
    return %c0_i32, %c0_i32_0 : i32, i32
  }
  func.func @transform_3(%arg0: i32) -> (i32, i32, i32) {
    %c0_i32 = arith.constant 0 : i32
    %c0_i32_0 = arith.constant 0 : i32
    %c0_i32_1 = arith.constant 0 : i32
    %c0_i32_2 = arith.constant 0 : i32
    return %c0_i32, %c0_i32_0, %c0_i32_1 : i32, i32, i32
  }
  func.func @transform_4(%arg0: i32) -> (i32, i32, i32) {
    %c0_i32 = arith.constant 0 : i32
    %c0_i32_0 = arith.constant 0 : i32
    %c0_i32_1 = arith.constant 0 : i32
    %c0_i32_2 = arith.constant 0 : i32
    return %c0_i32, %c0_i32_0, %c0_i32_1 : i32, i32, i32
  }
  func.func @transform_5(%arg0: i32) -> (i32, i32) {
    %c0_i32 = arith.constant 0 : i32
    %c0_i32_0 = arith.constant 0 : i32
    %c0_i32_1 = arith.constant 0 : i32
    return %c0_i32, %c0_i32_0 : i32, i32
  }
  func.func @transform_6(%arg0: i32) -> (i32, i32) {
    %c0_i32 = arith.constant 0 : i32
    %c0_i32_0 = arith.constant 0 : i32
    %c0_i32_1 = arith.constant 0 : i32
    return %c0_i32, %c0_i32_0 : i32, i32
  }
  func.func @transform_7(%arg0: i32) -> (i32, i32) {
    %c0_i32 = arith.constant 0 : i32
    %c0_i32_0 = arith.constant 0 : i32
    return %c0_i32, %arg0 : i32, i32
  }
}

</mosaic_0001>

<llo_original>
// kernel: tpu_custom_call.1
$region0: #{tpu_custom_call.1}
  #allocation0 [shape = 'u32[]', space=smem, size = 0x4, offset = 0x4, fixed_abs, tag = 'smem constant byte address 0x4 - core index']
  #allocation1 [shape = 'u32[72,128]{1,0:T(1,128)}', space=vmem, size = 0x9000, scoped, tag = 'internal scratch']
  #allocation2 [shape = 'f32[1,1]{1,0:T(1,128)S(1)}', space=vmem, size = 0x200, scoped, tag = 'scoped memory for tpu_custom_call.1']
  %s0 = inlined_call_operand.vmem [shape: f32[2,8], index: 0, kind: input, shape index: {}]
  %s1 = inlined_call_operand.vmem [shape: f32[32,2], index: 1, kind: input, shape index: {}]
  %s2 = inlined_call_operand.vmem [shape: f32[32,1], index: 2, kind: input, shape index: {}]
  %s3 = inlined_call_operand.vmem [shape: bf16[7,32,32], index: 3, kind: input, shape index: {}]
  %s4 = inlined_call_operand.vmem [shape: f32[7,32,1], index: 4, kind: input, shape index: {}]
  %s5 = inlined_call_operand.vmem [shape: f32[32,1], index: 5, kind: input, shape index: {}]
  %s6 = inlined_call_operand.<no memory space> [shape: f32[1,1], index: 6, kind: input, shape index: {}]
  %s7 = inlined_call_operand.hbm [shape: f32[1,8], index: 7, kind: output, shape index: {}]
  %s8 = sld [smem:[#allocation0]]
  $region38: #{tpu_custom_call.1} parent=0
    _
  %s10 = ssub.s32 1, %s8
  %s11 = scalar_select 0, %s10, %s8
  %v12 = vstv %s6
  %13 = vst [vmem:[#allocation2] sm:$0x1] %v12
  $region1: #{tpu_custom_call.1} parent=0
    #allocation3 [shape = 'u8[512]{0}', space=vmem, size = 0x400, scoped, tag = 'output window, operand 0, single buffered']
    #allocation4 [shape = 's32[1]{0}', space=sflag, size = 0x4, scoped, tag = 'scoped memory for tpu_custom_call.1']
    %14 = vsyncpa [#allocation4], 0
    // Predicated region
    $region2: #{tpu_custom_call.1} parent=1 // pred_check
      _
    $region3: #{tpu_custom_call.1} parent=1 // pred_check_branch
      %16 = sbr.rel (0) target = $region5
    $region4: #{tpu_custom_call.1} parent=1 // pred_region
      _
    $region5: #{tpu_custom_call.1} parent=1 // pred_fallthru
      _
    // Predicated region
    $region6: #{tpu_custom_call.1} parent=1 // pred_check
      _
    $region7: #{tpu_custom_call.1} parent=1 // pred_check_branch
      %18 = sbr.rel (0) target = $region9
    $region8: #{tpu_custom_call.1} parent=1 // pred_region
      _
    $region9: #{tpu_custom_call.1} parent=1 // pred_fallthru
      _
    // Predicated region
    $region10: #{tpu_custom_call.1} parent=1 // pred_check
      _
    $region11: #{tpu_custom_call.1} parent=1 // pred_check_branch
      %20 = sbr.rel (0) target = $region13
    $region12: #{tpu_custom_call.1} parent=1 // pred_region
      _
    $region13: #{tpu_custom_call.1} parent=1 // pred_fallthru
      _
    // Predicated region
    $region14: #{tpu_custom_call.1} parent=1 // pred_check
      _
    $region15: #{tpu_custom_call.1} parent=1 // pred_check_branch
      %22 = sbr.rel (0) target = $region17
    $region16: #{tpu_custom_call.1} parent=1 // pred_region
      _
    $region17: #{tpu_custom_call.1} parent=1 // pred_fallthru
      _
    // Predicated region
    $region18: #{tpu_custom_call.1} parent=1 // pred_check
      _
    $region19: #{tpu_custom_call.1} parent=1 // pred_check_branch
      %24 = sbr.rel (0) target = $region21
    $region20: #{tpu_custom_call.1} parent=1 // pred_region
      _
    $region21: #{tpu_custom_call.1} parent=1 // pred_fallthru
      _
    // Predicated region
    $region22: #{tpu_custom_call.1} parent=1 // pred_check
      _
    $region23: #{tpu_custom_call.1} parent=1 // pred_check_branch
      %26 = sbr.rel (0) target = $region25
    $region24: #{tpu_custom_call.1} parent=1 // pred_region
      _
    $region25: #{tpu_custom_call.1} parent=1 // pred_fallthru
      _
    // Predicated region
    $region26: #{tpu_custom_call.1} parent=1 // pred_check
      _
    $region27: #{tpu_custom_call.1} parent=1 // pred_check_branch
      %28 = sbr.rel (0) target = $region29
    $region28: #{tpu_custom_call.1} parent=1 // pred_region
      _
    $region29: #{tpu_custom_call.1} parent=1 // pred_fallthru
      _
    %v30 = vld [vmem:[%s0] sm:$0x1]
    %v31 = vld [vmem:[%s0 + $0x1] sm:$0x1]
    %v32 = vld [vmem:[%s1] sm:$0xff]
    %v33 = vld [vmem:[%s1 + $0x8] sm:$0xff]
    %v34 = vld [vmem:[%s1 + $0x10] sm:$0xff]
    %v35 = vld [vmem:[%s1 + $0x18] sm:$0xff]
    %37 = vset.pattern.permute.xlu0 0
    %38 = vperm.xlu0 %37, %v32
    %v39 = vpop.permute.xlu0 %38
    %42 = vset.pattern.permute.xlu0 0
    %43 = vperm.xlu0 %42, %v33
    %v44 = vpop.permute.xlu0 %43
    %47 = vset.pattern.permute.xlu0 0
    %48 = vperm.xlu0 %47, %v34
    %v49 = vpop.permute.xlu0 %48
    %52 = vset.pattern.permute.xlu0 0
    %53 = vperm.xlu0 %52, %v35
    %v54 = vpop.permute.xlu0 %53
    %v56 = vperm.slane %v30, 0
    %v57 = vmul.f32 %v39, %v56
    %v58 = vmul.f32 %v44, %v56
    %v59 = vmul.f32 %v49, %v56
    %v60 = vmul.f32 %v54, %v56
    %61 = vset.pattern.permute.xlu0 1
    %62 = vperm.xlu0 %61, %v32
    %v63 = vpop.permute.xlu0 %62
    %65 = vset.pattern.permute.xlu0 1
    %66 = vperm.xlu0 %65, %v33
    %v67 = vpop.permute.xlu0 %66
    %69 = vset.pattern.permute.xlu0 1
    %70 = vperm.xlu0 %69, %v34
    %v71 = vpop.permute.xlu0 %70
    %73 = vset.pattern.permute.xlu0 1
    %74 = vperm.xlu0 %73, %v35
    %v75 = vpop.permute.xlu0 %74
    %v77 = vperm.slane %v31, 0
    %v78 = vmul.f32 %v63, %v77
    %v79 = vmul.f32 %v67, %v77
    %v80 = vmul.f32 %v71, %v77
    %v81 = vmul.f32 %v75, %v77
    %v82 = vadd.f32 %v57, %v78
    %v83 = vadd.f32 %v58, %v79
    %v84 = vadd.f32 %v59, %v80
    %v85 = vadd.f32 %v60, %v81
    %v86 = vld [vmem:[%s2] sm:$0xff]
    %v87 = vld [vmem:[%s2 + $0x8] sm:$0xff]
    %v88 = vld [vmem:[%s2 + $0x10] sm:$0xff]
    %v89 = vld [vmem:[%s2 + $0x18] sm:$0xff]
    %91 = vset.pattern.permute.xlu0 0
    %92 = vperm.xlu0 %91, %v86
    %v93 = vpop.permute.xlu0 %92
    %96 = vset.pattern.permute.xlu0 0
    %97 = vperm.xlu0 %96, %v87
    %v98 = vpop.permute.xlu0 %97
    %101 = vset.pattern.permute.xlu0 0
    %102 = vperm.xlu0 %101, %v88
    %v103 = vpop.permute.xlu0 %102
    %106 = vset.pattern.permute.xlu0 0
    %107 = vperm.xlu0 %106, %v89
    %v108 = vpop.permute.xlu0 %107
    %v110 = vadd.f32 %v82, %v93
    %v111 = vadd.f32 %v83, %v98
    %v112 = vadd.f32 %v84, %v103
    %v113 = vadd.f32 %v85, %v108
    %v114 = vtanh.pop %v110
    %v115 = vtanh.pop %v111
    %v116 = vtanh.pop %v112
    %v117 = vtanh.pop %v113
    %v118 = vld [vmem:[%s3] sm:$0xf]
    %v119 = vld [vmem:[%s3 + $0x4] sm:$0xf]
    %v120 = vld [vmem:[%s3 + $0x8] sm:$0xf]
    %v121 = vld [vmem:[%s3 + $0xc] sm:$0xf]
    %v122 = vpack.c.bf16 %v115, %v114
    %v123 = vpack.c.bf16 %v117, %v116
    %v124 = vld [vmem:[%s4] sm:$0xff]
    %v125 = vld [vmem:[%s4 + $0x8] sm:$0xff]
    %v126 = vld [vmem:[%s4 + $0x10] sm:$0xff]
    %v127 = vld [vmem:[%s4 + $0x18] sm:$0xff]
    %129 = vset.pattern.permute.xlu0 0
    %130 = vperm.xlu0 %129, %v124
    %v131 = vpop.permute.xlu0 %130
    %134 = vset.pattern.permute.xlu0 0
    %135 = vperm.xlu0 %134, %v125
    %v136 = vpop.permute.xlu0 %135
    %139 = vset.pattern.permute.xlu0 0
    %140 = vperm.xlu0 %139, %v126
    %v141 = vpop.permute.xlu0 %140
    %144 = vset.pattern.permute.xlu0 0
    %145 = vperm.xlu0 %144, %v127
    %v146 = vpop.permute.xlu0 %145
    %v152 = vunpack.c.l.b16 %v118
    %v153 = vunpack.c.l.b16 %v119
    %v154 = vunpack.c.l.b16 %v120
    %v155 = vunpack.c.l.b16 %v121
    %v156 = vpack.c.b16 %v153, %v152
    %v157 = vpack.c.b16 %v155, %v154
    %vm158 = vcmask 261120
    %v160 = vsel %vm158, %v156, 0
    %v163 = vsel %vm158, %v157, 0
    %165 = vmatpush.bf16.msra.mxu0 0
    %166 = vmatpush.bf16.msra.mxu0 0
    %167 = vmatpush.bf16.msra.mxu0 0
    %168 = vmatpush.bf16.msra.mxu0 0
    %169 = vmatpush.bf16.msra.mxu0 0
    %170 = vmatpush.bf16.msra.mxu0 0
    %171 = vmatpush.bf16.msra.mxu0 %v123
    %172 = vmatpush.bf16.msra.mxu0 %v122
    %173 = vmatmul.bf16.gmra.mxu0 %v160
    %v174 = vpop.f32.mrf.mxu0
    %v175 = vadd.f32 %v131, %v174
    %v176 = vpop.f32.mrf.mxu0
    %v177 = vadd.f32 %v136, %v176
    %178 = vmatmul.bf16.gmra.mxu0 %v163
    %v179 = vpop.f32.mrf.mxu0
    %v180 = vadd.f32 %v141, %v179
    %v181 = vpop.f32.mrf.mxu0
    %v182 = vadd.f32 %v146, %v181
    %183 = vdwg.mxu0
    %v184 = vtanh.pop %v175
    %v185 = vtanh.pop %v177
    %v186 = vtanh.pop %v180
    %v187 = vtanh.pop %v182
    %s188 = scalar_lea.vmem %s3, 16
    %v189 = vld [vmem:[%s188] sm:$0xf]
    %v190 = vld [vmem:[%s188 + $0x4] sm:$0xf]
    %v191 = vld [vmem:[%s188 + $0x8] sm:$0xf]
    %v192 = vld [vmem:[%s188 + $0xc] sm:$0xf]
    %v193 = vpack.c.bf16 %v185, %v184
    %v194 = vpack.c.bf16 %v187, %v186
    %s195 = scalar_lea.vmem %s4, 32
    %v196 = vld [vmem:[%s195] sm:$0xff]
    %v197 = vld [vmem:[%s195 + $0x8] sm:$0xff]
    %v198 = vld [vmem:[%s195 + $0x10] sm:$0xff]
    %v199 = vld [vmem:[%s195 + $0x18] sm:$0xff]
    %201 = vset.pattern.permute.xlu0 0
    %202 = vperm.xlu0 %201, %v196
    %v203 = vpop.permute.xlu0 %202
    %206 = vset.pattern.permute.xlu0 0
    %207 = vperm.xlu0 %206, %v197
    %v208 = vpop.permute.xlu0 %207
    %211 = vset.pattern.permute.xlu0 0
    %212 = vperm.xlu0 %211, %v198
    %v213 = vpop.permute.xlu0 %212
    %216 = vset.pattern.permute.xlu0 0
    %217 = vperm.xlu0 %216, %v199
    %v218 = vpop.permute.xlu0 %217
    %v224 = vunpack.c.l.b16 %v189
    %v225 = vunpack.c.l.b16 %v190
    %v226 = vunpack.c.l.b16 %v191
    %v227 = vunpack.c.l.b16 %v192
    %v228 = vpack.c.b16 %v225, %v224
    %v229 = vpack.c.b16 %v227, %v226
    %v231 = vsel %vm158, %v228, 0
    %v234 = vsel %vm158, %v229, 0
    %236 = vmatpush.bf16.msra.mxu0 0
    %237 = vmatpush.bf16.msra.mxu0 0
    %238 = vmatpush.bf16.msra.mxu0 0
    %239 = vmatpush.bf16.msra.mxu0 0
    %240 = vmatpush.bf16.msra.mxu0 0
    %241 = vmatpush.bf16.msra.mxu0 0
    %242 = vmatpush.bf16.msra.mxu0 %v194
    %243 = vmatpush.bf16.msra.mxu0 %v193
    %244 = vmatmul.bf16.gmra.mxu0 %v231
    %v245 = vpop.f32.mrf.mxu0
    %v246 = vadd.f32 %v203, %v245
    %v247 = vpop.f32.mrf.mxu0
    %v248 = vadd.f32 %v208, %v247
    %249 = vmatmul.bf16.gmra.mxu0 %v234
    %v250 = vpop.f32.mrf.mxu0
    %v251 = vadd.f32 %v213, %v250
    %v252 = vpop.f32.mrf.mxu0
    %v253 = vadd.f32 %v218, %v252
    %254 = vdwg.mxu0
    %v255 = vtanh.pop %v246
    %v256 = vtanh.pop %v248
    %v257 = vtanh.pop %v251
    %v258 = vtanh.pop %v253
    %s259 = scalar_lea.vmem %s3, 32
    %v260 = vld [vmem:[%s259] sm:$0xf]
    %v261 = vld [vmem:[%s259 + $0x4] sm:$0xf]
    %v262 = vld [vmem:[%s259 + $0x8] sm:$0xf]
    %v263 = vld [vmem:[%s259 + $0xc] sm:$0xf]
    %v264 = vpack.c.bf16 %v256, %v255
    %v265 = vpack.c.bf16 %v258, %v257
    %s266 = scalar_lea.vmem %s4, 64
    %v267 = vld [vmem:[%s266] sm:$0xff]
    %v268 = vld [vmem:[%s266 + $0x8] sm:$0xff]
    %v269 = vld [vmem:[%s266 + $0x10] sm:$0xff]
    %v270 = vld [vmem:[%s266 + $0x18] sm:$0xff]
    %272 = vset.pattern.permute.xlu0 0
    %273 = vperm.xlu0 %272, %v267
    %v274 = vpop.permute.xlu0 %273
    %277 = vset.pattern.permute.xlu0 0
    %278 = vperm.xlu0 %277, %v268
    %v279 = vpop.permute.xlu0 %278
    %282 = vset.pattern.permute.xlu0 0
    %283 = vperm.xlu0 %282, %v269
    %v284 = vpop.permute.xlu0 %283
    %287 = vset.pattern.permute.xlu0 0
    %288 = vperm.xlu0 %287, %v270
    %v289 = vpop.permute.xlu0 %288
    %v295 = vunpack.c.l.b16 %v260
    %v296 = vunpack.c.l.b16 %v261
    %v297 = vunpack.c.l.b16 %v262
    %v298 = vunpack.c.l.b16 %v263
    %v299 = vpack.c.b16 %v296, %v295
    %v300 = vpack.c.b16 %v298, %v297
    %v302 = vsel %vm158, %v299, 0
    %v305 = vsel %vm158, %v300, 0
    %307 = vmatpush.bf16.msra.mxu0 0
    %308 = vmatpush.bf16.msra.mxu0 0
    %309 = vmatpush.bf16.msra.mxu0 0
    %310 = vmatpush.bf16.msra.mxu0 0
    %311 = vmatpush.bf16.msra.mxu0 0
    %312 = vmatpush.bf16.msra.mxu0 0
    %313 = vmatpush.bf16.msra.mxu0 %v265
    %314 = vmatpush.bf16.msra.mxu0 %v264
    %315 = vmatmul.bf16.gmra.mxu0 %v302
    %v316 = vpop.f32.mrf.mxu0
    %v317 = vadd.f32 %v274, %v316
    %v318 = vpop.f32.mrf.mxu0
    %v319 = vadd.f32 %v279, %v318
    %320 = vmatmul.bf16.gmra.mxu0 %v305
    %v321 = vpop.f32.mrf.mxu0
    %v322 = vadd.f32 %v284, %v321
    %v323 = vpop.f32.mrf.mxu0
    %v324 = vadd.f32 %v289, %v323
    %325 = vdwg.mxu0
    %v326 = vtanh.pop %v317
    %v327 = vtanh.pop %v319
    %v328 = vtanh.pop %v322
    %v329 = vtanh.pop %v324
    %s330 = scalar_lea.vmem %s3, 48
    %v331 = vld [vmem:[%s330] sm:$0xf]
    %v332 = vld [vmem:[%s330 + $0x4] sm:$0xf]
    %v333 = vld [vmem:[%s330 + $0x8] sm:$0xf]
    %v334 = vld [vmem:[%s330 + $0xc] sm:$0xf]
    %v335 = vpack.c.bf16 %v327, %v326
    %v336 = vpack.c.bf16 %v329, %v328
    %s337 = scalar_lea.vmem %s4, 96
    %v338 = vld [vmem:[%s337] sm:$0xff]
    %v339 = vld [vmem:[%s337 + $0x8] sm:$0xff]
    %v340 = vld [vmem:[%s337 + $0x10] sm:$0xff]
    %v341 = vld [vmem:[%s337 + $0x18] sm:$0xff]
    %343 = vset.pattern.permute.xlu0 0
    %344 = vperm.xlu0 %343, %v338
    %v345 = vpop.permute.xlu0 %344
    %348 = vset.pattern.permute.xlu0 0
    %349 = vperm.xlu0 %348, %v339
    %v350 = vpop.permute.xlu0 %349
    %353 = vset.pattern.permute.xlu0 0
    %354 = vperm.xlu0 %353, %v340
    %v355 = vpop.permute.xlu0 %354
    %358 = vset.pattern.permute.xlu0 0
    %359 = vperm.xlu0 %358, %v341
    %v360 = vpop.permute.xlu0 %359
    %v366 = vunpack.c.l.b16 %v331
    %v367 = vunpack.c.l.b16 %v332
    %v368 = vunpack.c.l.b16 %v333
    %v369 = vunpack.c.l.b16 %v334
    %v370 = vpack.c.b16 %v367, %v366
    %v371 = vpack.c.b16 %v369, %v368
    %v373 = vsel %vm158, %v370, 0
    %v376 = vsel %vm158, %v371, 0
    %378 = vmatpush.bf16.msra.mxu0 0
    %379 = vmatpush.bf16.msra.mxu0 0
    %380 = vmatpush.bf16.msra.mxu0 0
    %381 = vmatpush.bf16.msra.mxu0 0
    %382 = vmatpush.bf16.msra.mxu0 0
    %383 = vmatpush.bf16.msra.mxu0 0
    %384 = vmatpush.bf16.msra.mxu0 %v336
    %385 = vmatpush.bf16.msra.mxu0 %v335
    %386 = vmatmul.bf16.gmra.mxu0 %v373
    %v387 = vpop.f32.mrf.mxu0
    %v388 = vadd.f32 %v345, %v387
    %v389 = vpop.f32.mrf.mxu0
    %v390 = vadd.f32 %v350, %v389
    %391 = vmatmul.bf16.gmra.mxu0 %v376
    %v392 = vpop.f32.mrf.mxu0
    %v393 = vadd.f32 %v355, %v392
    %v394 = vpop.f32.mrf.mxu0
    %v395 = vadd.f32 %v360, %v394
    %396 = vdwg.mxu0
    %v397 = vtanh.pop %v388
    %v398 = vtanh.pop %v390
    %v399 = vtanh.pop %v393
    %v400 = vtanh.pop %v395
    %s401 = scalar_lea.vmem %s3, 64
    %v402 = vld [vmem:[%s401] sm:$0xf]
    %v403 = vld [vmem:[%s401 + $0x4] sm:$0xf]
    %v404 = vld [vmem:[%s401 + $0x8] sm:$0xf]
    %v405 = vld [vmem:[%s401 + $0xc] sm:$0xf]
    %v406 = vpack.c.bf16 %v398, %v397
    %v407 = vpack.c.bf16 %v400, %v399
    %s408 = scalar_lea.vmem %s4, 128
    %v409 = vld [vmem:[%s408] sm:$0xff]
    %v410 = vld [vmem:[%s408 + $0x8] sm:$0xff]
    %v411 = vld [vmem:[%s408 + $0x10] sm:$0xff]
    %v412 = vld [vmem:[%s408 + $0x18] sm:$0xff]
    %414 = vset.pattern.permute.xlu0 0
    %415 = vperm.xlu0 %414, %v409
    %v416 = vpop.permute.xlu0 %415
    %419 = vset.pattern.permute.xlu0 0
    %420 = vperm.xlu0 %419, %v410
    %v421 = vpop.permute.xlu0 %420
    %424 = vset.pattern.permute.xlu0 0
    %425 = vperm.xlu0 %424, %v411
    %v426 = vpop.permute.xlu0 %425
    %429 = vset.pattern.permute.xlu0 0
    %430 = vperm.xlu0 %429, %v412
    %v431 = vpop.permute.xlu0 %430
    %v437 = vunpack.c.l.b16 %v402
    %v438 = vunpack.c.l.b16 %v403
    %v439 = vunpack.c.l.b16 %v404
    %v440 = vunpack.c.l.b16 %v405
    %v441 = vpack.c.b16 %v438, %v437
    %v442 = vpack.c.b16 %v440, %v439
    %v444 = vsel %vm158, %v441, 0
    %v447 = vsel %vm158, %v442, 0
    %449 = vmatpush.bf16.msra.mxu0 0
    %450 = vmatpush.bf16.msra.mxu0 0
    %451 = vmatpush.bf16.msra.mxu0 0
    %452 = vmatpush.bf16.msra.mxu0 0
    %453 = vmatpush.bf16.msra.mxu0 0
    %454 = vmatpush.bf16.msra.mxu0 0
    %455 = vmatpush.bf16.msra.mxu0 %v407
    %456 = vmatpush.bf16.msra.mxu0 %v406
    %457 = vmatmul.bf16.gmra.mxu0 %v444
    %v458 = vpop.f32.mrf.mxu0
    %v459 = vadd.f32 %v416, %v458
    %v460 = vpop.f32.mrf.mxu0
    %v461 = vadd.f32 %v421, %v460
    %462 = vmatmul.bf16.gmra.mxu0 %v447
    %v463 = vpop.f32.mrf.mxu0
    %v464 = vadd.f32 %v426, %v463
    %v465 = vpop.f32.mrf.mxu0
    %v466 = vadd.f32 %v431, %v465
    %467 = vdwg.mxu0
    %v468 = vtanh.pop %v459
    %v469 = vtanh.pop %v461
    %v470 = vtanh.pop %v464
    %v471 = vtanh.pop %v466
    %s472 = scalar_lea.vmem %s3, 80
    %v473 = vld [vmem:[%s472] sm:$0xf]
    %v474 = vld [vmem:[%s472 + $0x4] sm:$0xf]
    %v475 = vld [vmem:[%s472 + $0x8] sm:$0xf]
    %v476 = vld [vmem:[%s472 + $0xc] sm:$0xf]
    %v477 = vpack.c.bf16 %v469, %v468
    %v478 = vpack.c.bf16 %v471, %v470
    %s479 = scalar_lea.vmem %s4, 160
    %v480 = vld [vmem:[%s479] sm:$0xff]
    %v481 = vld [vmem:[%s479 + $0x8] sm:$0xff]
    %v482 = vld [vmem:[%s479 + $0x10] sm:$0xff]
    %v483 = vld [vmem:[%s479 + $0x18] sm:$0xff]
    %485 = vset.pattern.permute.xlu0 0
    %486 = vperm.xlu0 %485, %v480
    %v487 = vpop.permute.xlu0 %486
    %490 = vset.pattern.permute.xlu0 0
    %491 = vperm.xlu0 %490, %v481
    %v492 = vpop.permute.xlu0 %491
    %495 = vset.pattern.permute.xlu0 0
    %496 = vperm.xlu0 %495, %v482
    %v497 = vpop.permute.xlu0 %496
    %500 = vset.pattern.permute.xlu0 0
    %501 = vperm.xlu0 %500, %v483
    %v502 = vpop.permute.xlu0 %501
    %v508 = vunpack.c.l.b16 %v473
    %v509 = vunpack.c.l.b16 %v474
    %v510 = vunpack.c.l.b16 %v475
    %v511 = vunpack.c.l.b16 %v476
    %v512 = vpack.c.b16 %v509, %v508
    %v513 = vpack.c.b16 %v511, %v510
    %v515 = vsel %vm158, %v512, 0
    %v518 = vsel %vm158, %v513, 0
    %520 = vmatpush.bf16.msra.mxu0 0
    %521 = vmatpush.bf16.msra.mxu0 0
    %522 = vmatpush.bf16.msra.mxu0 0
    %523 = vmatpush.bf16.msra.mxu0 0
    %524 = vmatpush.bf16.msra.mxu0 0
    %525 = vmatpush.bf16.msra.mxu0 0
    %526 = vmatpush.bf16.msra.mxu0 %v478
    %527 = vmatpush.bf16.msra.mxu0 %v477
    %528 = vmatmul.bf16.gmra.mxu0 %v515
    %v529 = vpop.f32.mrf.mxu0
    %v530 = vadd.f32 %v487, %v529
    %v531 = vpop.f32.mrf.mxu0
    %v532 = vadd.f32 %v492, %v531
    %533 = vmatmul.bf16.gmra.mxu0 %v518
    %v534 = vpop.f32.mrf.mxu0
    %v535 = vadd.f32 %v497, %v534
    %v536 = vpop.f32.mrf.mxu0
    %v537 = vadd.f32 %v502, %v536
    %538 = vdwg.mxu0
    %v539 = vtanh.pop %v530
    %v540 = vtanh.pop %v532
    %v541 = vtanh.pop %v535
    %v542 = vtanh.pop %v537
    %s543 = scalar_lea.vmem %s3, 96
    %v544 = vld [vmem:[%s543] sm:$0xf]
    %v545 = vld [vmem:[%s543 + $0x4] sm:$0xf]
    %v546 = vld [vmem:[%s543 + $0x8] sm:$0xf]
    %v547 = vld [vmem:[%s543 + $0xc] sm:$0xf]
    %v548 = vpack.c.bf16 %v540, %v539
    %v549 = vpack.c.bf16 %v542, %v541
    %s550 = scalar_lea.vmem %s4, 192
    %v551 = vld [vmem:[%s550] sm:$0xff]
    %v552 = vld [vmem:[%s550 + $0x8] sm:$0xff]
    %v553 = vld [vmem:[%s550 + $0x10] sm:$0xff]
    %v554 = vld [vmem:[%s550 + $0x18] sm:$0xff]
    %556 = vset.pattern.permute.xlu0 0
    %557 = vperm.xlu0 %556, %v551
    %v558 = vpop.permute.xlu0 %557
    %561 = vset.pattern.permute.xlu0 0
    %562 = vperm.xlu0 %561, %v552
    %v563 = vpop.permute.xlu0 %562
    %566 = vset.pattern.permute.xlu0 0
    %567 = vperm.xlu0 %566, %v553
    %v568 = vpop.permute.xlu0 %567
    %571 = vset.pattern.permute.xlu0 0
    %572 = vperm.xlu0 %571, %v554
    %v573 = vpop.permute.xlu0 %572
    %v579 = vunpack.c.l.b16 %v544
    %v580 = vunpack.c.l.b16 %v545
    %v581 = vunpack.c.l.b16 %v546
    %v582 = vunpack.c.l.b16 %v547
    %v583 = vpack.c.b16 %v580, %v579
    %v584 = vpack.c.b16 %v582, %v581
    %v586 = vsel %vm158, %v583, 0
    %v589 = vsel %vm158, %v584, 0
    %591 = vmatpush.bf16.msra.mxu0 0
    %592 = vmatpush.bf16.msra.mxu0 0
    %593 = vmatpush.bf16.msra.mxu0 0
    %594 = vmatpush.bf16.msra.mxu0 0
    %595 = vmatpush.bf16.msra.mxu0 0
    %596 = vmatpush.bf16.msra.mxu0 0
    %597 = vmatpush.bf16.msra.mxu0 %v549
    %598 = vmatpush.bf16.msra.mxu0 %v548
    %599 = vmatmul.bf16.gmra.mxu0 %v586
    %v600 = vpop.f32.mrf.mxu0
    %v601 = vadd.f32 %v558, %v600
    %v602 = vpop.f32.mrf.mxu0
    %v603 = vadd.f32 %v563, %v602
    %604 = vmatmul.bf16.gmra.mxu0 %v589
    %v605 = vpop.f32.mrf.mxu0
    %v606 = vadd.f32 %v568, %v605
    %v607 = vpop.f32.mrf.mxu0
    %v608 = vadd.f32 %v573, %v607
    %609 = vdwg.mxu0
    %v610 = vtanh.pop %v601
    %v611 = vtanh.pop %v603
    %v612 = vtanh.pop %v606
    %v613 = vtanh.pop %v608
    %v614 = vld [vmem:[%s5] sm:$0xff]
    %v615 = vld [vmem:[%s5 + $0x8] sm:$0xff]
    %v616 = vld [vmem:[%s5 + $0x10] sm:$0xff]
    %v617 = vld [vmem:[%s5 + $0x18] sm:$0xff]
    %619 = vset.pattern.permute.xlu0 0
    %620 = vperm.xlu0 %619, %v614
    %v621 = vpop.permute.xlu0 %620
    %624 = vset.pattern.permute.xlu0 0
    %625 = vperm.xlu0 %624, %v615
    %v626 = vpop.permute.xlu0 %625
    %629 = vset.pattern.permute.xlu0 0
    %630 = vperm.xlu0 %629, %v616
    %v631 = vpop.permute.xlu0 %630
    %634 = vset.pattern.permute.xlu0 0
    %635 = vperm.xlu0 %634, %v617
    %v636 = vpop.permute.xlu0 %635
    %v638 = vmul.f32 %v621, %v610
    %v639 = vmul.f32 %v626, %v611
    %v640 = vmul.f32 %v631, %v612
    %v641 = vmul.f32 %v636, %v613
    %v642 = vadd.f32 %v638, %v639
    %v643 = vadd.f32 %v642, %v640
    %v644 = vadd.f32 %v643, %v641
    %v645 = vrot.slane %v644, 4
    %v646 = vadd.f32 %v644, %v645
    %v647 = vrot.slane %v646, 2
    %v648 = vadd.f32 %v646, %v647
    %v649 = vrot.slane %v648, 1
    %v650 = vadd.f32 %v648, %v649
    %v651 = vld [vmem:[#allocation2] sm:$0x1]
    %653 = vset.pattern.permute.xlu0 0
    %654 = vperm.xlu0 %653, %v651
    %v655 = vpop.permute.xlu0 %654
    %v657 = vperm.slane %v655, 0
    %v658 = vadd.f32 %v650, %v657
    %659 = vst [vmem:[#allocation3] sm:$0x1] %v658
    // Predicated region
    $region30: #{tpu_custom_call.1} parent=1 // pred_check
      _
    $region31: #{tpu_custom_call.1} parent=1 // pred_check_branch
      %661 = sbr.rel (0) target = $region33
    $region32: #{tpu_custom_call.1} parent=1 // pred_region
      %663 = vsyncadd [#allocation4], 0
      %s665 = sshll.u32 [#allocation3], 4
      %s666 = int_to_ptr.vmem [resolvable:$true] %s665
      %s667 = sshll.u32 %s7, 4
      %s668 = int_to_ptr.hbm [resolvable:$true] %s667
      %670 = dma.vmem_to_hbm [thread:$0]  %s666, 16, %s668, [#allocation4]
    $region33: #{tpu_custom_call.1} parent=1 // pred_fallthru
      _
    // Predicated region
    $region34: #{tpu_custom_call.1} parent=1 // pred_check
      _
    $region35: #{tpu_custom_call.1} parent=1 // pred_check_branch
      %672 = sbr.rel (0) target = $region37
    $region36: #{tpu_custom_call.1} parent=1 // pred_region
      %674 = dma.done [#allocation4], 16
    $region37: #{tpu_custom_call.1} parent=1 // pred_fallthru
      _
    %675 = vsyncpa [#allocation4], 1

</llo_original>
